<compile_context>
chip_gen: v6e
topology: v6e:2x2x1
jax: 0.10.0
libtpu: 0.0.40
codegen_flags: <defaults>
</compile_context>

<pallas_src>
import functools

import jax
import jax.numpy as jnp
from jax import lax
from jax.experimental import pallas as pl
from jax.experimental.pallas import tpu as pltpu

EPS = 1e-5


# ---------------------------------------------------------------------------
# Chip-aware queries
# ---------------------------------------------------------------------------
def _vmem_budget_bytes():
    """Usable per-kernel VMEM budget, derived from the chip's physical VMEM."""
    try:
        cap = int(pltpu.get_tpu_info().vmem_capacity_bytes)
    except Exception:
        cap = 64 << 20  # conservative default: v7x physical VMEM
    # Leave headroom for compiler-internal scratch / double buffering.
    return max(int(cap * 3 // 4), 16 << 20)  # ~48 MiB on v7x, ~96 MiB on v5e/v6e


def _bf16_elementwise_ok():
    """True on chips with a bf16 VPU datapath (v6e / v7x); False on v5e etc."""
    try:
        kind = jax.devices()[0].device_kind.lower()
    except Exception:
        return False
    for old in ("v2", "v3", "v4", "v5"):
        if old in kind:
            return False
    return ("v6" in kind) or ("v7" in kind)


# ---------------------------------------------------------------------------
# Shared BN helpers (train-mode BatchNorm1d: biased variance, eps=1e-5)
# ---------------------------------------------------------------------------
def _bn_relu(h_f32, gamma, beta, bf16_apply):
    """Full-batch BN over axis 0 + ReLU.  Stats in f32; apply optionally bf16.

    Returns bf16, ready to feed the next MXU pass (no separate cast needed).
    """
    mean = jnp.mean(h_f32, axis=0, keepdims=True)
    d = h_f32 - mean                                  # reused for var and norm
    var = jnp.mean(d * d, axis=0, keepdims=True)
    scale = lax.rsqrt(var + EPS) * gamma              # (1,H): EUP rsqrt + mul
    if bf16_apply:
        y = (d.astype(jnp.bfloat16) * scale.astype(jnp.bfloat16)
             + beta.astype(jnp.bfloat16))
        return jnp.maximum(y, 0.0)                    # bf16
    return jnp.maximum(d * scale + beta, 0.0).astype(jnp.bfloat16)


def _bn_relu_from_stats(h_f32, s, ss, gamma, beta, inv_b, bf16_apply):
    """BN apply from precomputed per-feature sum / sum-of-squares (two-pass BN)."""
    mean = s * inv_b
    var = ss * inv_b - mean * mean                    # biased variance
    scale = lax.rsqrt(var + EPS) * gamma
    d = h_f32 - mean
    if bf16_apply:
        y = (d.astype(jnp.bfloat16) * scale.astype(jnp.bfloat16)
             + beta.astype(jnp.bfloat16))
        return jnp.maximum(y, 0.0)
    return jnp.maximum(d * scale + beta, 0.0).astype(jnp.bfloat16)


# ---------------------------------------------------------------------------
# BlockSpec helpers
# ---------------------------------------------------------------------------
def _const_spec(shape):
    nd = len(shape)
    return pl.BlockSpec(shape, lambda i: (0,) * nd)


def _row_spec(shape):
    nd = len(shape)
    return pl.BlockSpec(shape, lambda i: (i,) + (0,) * (nd - 1))


# ---------------------------------------------------------------------------
# Path A: fully fused, everything resident in VMEM (small / moderate sizes)
# ---------------------------------------------------------------------------
def _fused_kernel(x_ref,
                  w1_ref, g1_ref, be1_ref, w2_ref,
                  w3_ref, g2_ref, be2_ref, w4_ref, b4_ref,
                  out_ref, *, bf16_apply):
    x = x_ref[...]                                    # bf16 [B, D_in]

    # projector: Linear(no bias) -> BN -> ReLU -> Linear
    # (b2 is dropped: it only adds a batch-constant term that BN2 cancels).
    h = jnp.dot(x, w1_ref[...], preferred_element_type=jnp.float32)
    a = _bn_relu(h, g1_ref[...], be1_ref[...], bf16_apply)
    z = jnp.dot(a, w2_ref[...], preferred_element_type=jnp.float32)

    # predictor: Linear(no bias) -> BN -> ReLU -> Linear(+bias)
    h2 = jnp.dot(z.astype(jnp.bfloat16), w3_ref[...],
                 preferred_element_type=jnp.float32)
    a2 = _bn_relu(h2, g2_ref[...], be2_ref[...], bf16_apply)
    p = jnp.dot(a2, w4_ref[...], preferred_element_type=jnp.float32) + b4_ref[...]

    out_ref[...] = p.astype(out_ref.dtype)


def combined_forward_fused(x_bf16, params, *, bf16_apply=None, vmem_budget=None):
    B, D_in = x_bf16.shape
    H = params["w1"].shape[1]
    D_p = params["w4"].shape[1]
    if bf16_apply is None:
        bf16_apply = _bf16_elementwise_ok()
    if vmem_budget is None:
        vmem_budget = _vmem_budget_bytes()

    operands = (
        x_bf16,
        params["w1"], params["g1"], params["be1"], params["w2"],
        params["w3"], params["g2"], params["be2"], params["w4"], params["b4"],
    )

    operand_bytes = sum(int(a.size) * a.dtype.itemsize for a in operands)
    # f32 h/d + bf16 apply copies for both hidden blocks, z copies, output.
    inter_bytes = 5 * B * H * 4 + 3 * B * D_p * 4
    vmem_limit = min(2 * operand_bytes + inter_bytes + (4 << 20), vmem_budget)

    flops = 2 * B * (D_in * H + H * D_p + D_p * H + H * D_p)
    bytes_accessed = operand_bytes + B * D_p * 4

    return pl.pallas_call(
        functools.partial(_fused_kernel, bf16_apply=bf16_apply),
        out_shape=jax.ShapeDtypeStruct((B, D_p), jnp.float32),
        grid=(1,),
        in_specs=[_const_spec(a.shape) for a in operands],
        out_specs=_const_spec((B, D_p)),
        compiler_params=pltpu.CompilerParams(
            dimension_semantics=("arbitrary",),
            vmem_limit_bytes=int(vmem_limit)),
        cost_estimate=pl.CostEstimate(
            flops=int(flops),
            transcendentals=int(2 * H),
            bytes_accessed=int(bytes_accessed)),
    )(*operands)


# ---------------------------------------------------------------------------
# Path B: batch-tiled two-pass-BN pipeline (large B / real BYOL sizes / v7x)
#   pass 1: h = x@w1 per batch tile, accumulate per-feature sum/sumsq of h
#   pass 2: BN1-apply+ReLU, z=@w2, h2=z@w3 per tile, accumulate sum/sumsq of h2
#   pass 3: BN2-apply+ReLU, p=@w4+b4 per tile ("parallel" -> both v7x cores)
# ---------------------------------------------------------------------------
def _stats1_kernel(x_ref, w1_ref, h_ref, s_ref, ss_ref):
    @pl.when(pl.program_id(0) == 0)
    def _():
        s_ref[...] = jnp.zeros_like(s_ref)
        ss_ref[...] = jnp.zeros_like(ss_ref)

    h = jnp.dot(x_ref[...], w1_ref[...], preferred_element_type=jnp.float32)
    h_bf = h.astype(jnp.bfloat16)
    h_ref[...] = h_bf
    h32 = h_bf.astype(jnp.float32)          # stats over the values pass 2 reads
    s_ref[...] += jnp.sum(h32, axis=0, keepdims=True)
    ss_ref[...] += jnp.sum(h32 * h32, axis=0, keepdims=True)


def _mid_kernel(h_ref, s1_ref, ss1_ref, g1_ref, be1_ref, w2_ref, w3_ref,
                h2_ref, s2_ref, ss2_ref, *, inv_b, bf16_apply):
    @pl.when(pl.program_id(0) == 0)
    def _():
        s2_ref[...] = jnp.zeros_like(s2_ref)
        ss2_ref[...] = jnp.zeros_like(ss2_ref)

    a = _bn_relu_from_stats(h_ref[...].astype(jnp.float32),
                            s1_ref[...], ss1_ref[...],
                            g1_ref[...], be1_ref[...], inv_b, bf16_apply)
    z = jnp.dot(a, w2_ref[...], preferred_element_type=jnp.float32)   # b2 dropped
    h2 = jnp.dot(z.astype(jnp.bfloat16), w3_ref[...],
                 preferred_element_type=jnp.float32)
    h2_bf = h2.astype(jnp.bfloat16)
    h2_ref[...] = h2_bf
    h2_32 = h2_bf.astype(jnp.float32)
    s2_ref[...] += jnp.sum(h2_32, axis=0, keepdims=True)
    ss2_ref[...] += jnp.sum(h2_32 * h2_32, axis=0, keepdims=True)


def _final_kernel(h2_ref, s2_ref, ss2_ref, g2_ref, be2_ref, w4_ref, b4_ref,
                  out_ref, *, inv_b, bf16_apply):
    a2 = _bn_relu_from_stats(h2_ref[...].astype(jnp.float32),
                             s2_ref[...], ss2_ref[...],
                             g2_ref[...], be2_ref[...], inv_b, bf16_apply)
    p = jnp.dot(a2, w4_ref[...], preferred_element_type=jnp.float32) + b4_ref[...]
    out_ref[...] = p.astype(out_ref.dtype)


def combined_forward_tiled(x_bf16, params, *, batch_tile, bf16_apply=None,
                           vmem_budget=None):
    B, D_in = x_bf16.shape
    H = params["w1"].shape[1]
    D_p = params["w4"].shape[1]
    if bf16_apply is None:
        bf16_apply = _bf16_elementwise_ok()
    if vmem_budget is None:
        vmem_budget = _vmem_budget_bytes()
    assert B % batch_tile == 0, "batch_tile must divide the batch"
    nt = B // batch_tile
    inv_b = 1.0 / float(B)

    seq_params = pltpu.CompilerParams(dimension_semantics=("arbitrary",),
                                      vmem_limit_bytes=int(vmem_budget))
    par_params = pltpu.CompilerParams(dimension_semantics=("parallel",),
                                      vmem_limit_bytes=int(vmem_budget))

    # ---- pass 1: first matmul + BN1 statistics -------------------------------
    h, s1, ss1 = pl.pallas_call(
        _stats1_kernel,
        out_shape=(jax.ShapeDtypeStruct((B, H), jnp.bfloat16),
                   jax.ShapeDtypeStruct((1, H), jnp.float32),
                   jax.ShapeDtypeStruct((1, H), jnp.float32)),
        grid=(nt,),
        in_specs=[_row_spec((batch_tile, D_in)),
                  _const_spec(params["w1"].shape)],
        out_specs=(_row_spec((batch_tile, H)),
                   _const_spec((1, H)),
                   _const_spec((1, H))),
        compiler_params=seq_params,
    )(x_bf16, params["w1"])

    # ---- pass 2: BN1 apply + w2 + w3 + BN2 statistics -------------------------
    h2, s2, ss2 = pl.pallas_call(
        functools.partial(_mid_kernel, inv_b=inv_b, bf16_apply=bf16_apply),
        out_shape=(jax.ShapeDtypeStruct((B, H), jnp.bfloat16),
                   jax.ShapeDtypeStruct((1, H), jnp.float32),
                   jax.ShapeDtypeStruct((1, H), jnp.float32)),
        grid=(nt,),
        in_specs=[_row_spec((batch_tile, H)),
                  _const_spec((1, H)), _const_spec((1, H)),
                  _const_spec((1, H)), _const_spec((1, H)),
                  _const_spec(params["w2"].shape),
                  _const_spec(params["w3"].shape)],
        out_specs=(_row_spec((batch_tile, H)),
                   _const_spec((1, H)),
                   _const_spec((1, H))),
        compiler_params=seq_params,
    )(h, s1, ss1, params["g1"], params["be1"], params["w2"], params["w3"])

    # ---- pass 3: BN2 apply + final Linear (batch tiles independent) -----------
    out = pl.pallas_call(
        functools.partial(_final_kernel, inv_b=inv_b, bf16_apply=bf16_apply),
        out_shape=jax.ShapeDtypeStruct((B, D_p), jnp.float32),
        grid=(nt,),
        in_specs=[_row_spec((batch_tile, H)),
                  _const_spec((1, H)), _const_spec((1, H)),
                  _const_spec((1, H)), _const_spec((1, H)),
                  _const_spec(params["w4"].shape),
                  _const_spec(params["b4"].shape)],
        out_specs=_row_spec((batch_tile, D_p)),
        compiler_params=par_params,
    )(h2, s2, ss2, params["g2"], params["be2"], params["w4"], params["b4"])
    return out


# ---------------------------------------------------------------------------
# Dispatcher: fused if the resident footprint fits the chip's VMEM budget,
# otherwise the batch-tiled two-pass-BN pipeline.
# ---------------------------------------------------------------------------
def combined_forward(x_bf16, params):
    B, D_in = x_bf16.shape
    H = params["w1"].shape[1]
    D_p = params["w4"].shape[1]
    budget = _vmem_budget_bytes()

    weight_bytes = 2 * (D_in * H + 3 * H * D_p)          # bf16 weights
    small_bytes = 4 * (4 * H + 2 * D_p)                  # BN params + b4 (f32)
    operand_bytes = 2 * B * D_in + weight_bytes + small_bytes
    inter_bytes = 5 * B * H * 4 + 3 * B * D_p * 4
    needed = 2 * operand_bytes + inter_bytes + (4 << 20)

    if needed <= budget:
        return combined_forward_fused(x_bf16, params, vmem_budget=budget)

    # Size the batch tile so resident weights + per-tile intermediates fit.
    per_row_bytes = 24 * H + 12 * D_p
    avail = budget - 2 * weight_bytes - (8 << 20)
    tile = max(16, min(B, (avail // per_row_bytes) // 16 * 16))
    while tile > 16 and B % tile:
        tile -= 16
    if B % tile:
        tile = B
    return combined_forward_tiled(x_bf16, params, batch_tile=int(tile),
                                  vmem_budget=budget)


# ---------------------------------------------------------------------------
# Parameters & pure-JAX reference
# ---------------------------------------------------------------------------
def init_params(key, d_in, hidden, d_proj):
    ks = jax.random.split(key, 10)

    def linear_w(k, fan_in, fan_out):
        bound = 1.0 / jnp.sqrt(fan_in)
        w = jax.random.uniform(k, (fan_in, fan_out), jnp.float32, -bound, bound)
        return w.astype(jnp.bfloat16)

    def vec(k, n, scale=0.1):
        return scale * jax.random.normal(k, (1, n), jnp.float32)

    return {
        # projector
        "w1": linear_w(ks[0], d_in, hidden),
        "g1": 1.0 + vec(ks[1], hidden),
        "be1": vec(ks[2], hidden),
        "w2": linear_w(ks[3], hidden, d_proj),
        # b2 exists in the original module but is cancelled by BN2's mean
        # subtraction; kernels drop it, the module-faithful reference keeps it.
        "b2": vec(ks[4], d_proj),
        # predictor
        "w3": linear_w(ks[5], d_proj, hidden),
        "g2": 1.0 + vec(ks[6], hidden),
        "be2": vec(ks[7], hidden),
        "w4": linear_w(ks[8], hidden, d_proj),
        "b4": vec(ks[9], d_proj),
    }


def _reference(x_bf16, p, *, include_b2=True, bf16_apply=False):
    """Pure-JAX forward with the same mixed-precision recipe."""
    def dot(a, w):
        return jnp.dot(a.astype(jnp.bfloat16), w,
                       preferred_element_type=jnp.float32)

    def bn_relu(h, g, b):
        m = jnp.mean(h, axis=0, keepdims=True)
        d = h - m
        v = jnp.mean(d * d, axis=0, keepdims=True)
        s = lax.rsqrt(v + EPS) * g
        if bf16_apply:
            y = (d.astype(jnp.bfloat16) * s.astype(jnp.bfloat16)
                 + b.astype(jnp.bfloat16))
            return jnp.maximum(y, 0.0)
        return jnp.maximum(d * s + b, 0.0)

    h = bn_relu(dot(x_bf16, p["w1"]), p["g1"], p["be1"])
    z = dot(h, p["w2"])
    if include_b2:
        z = z + p["b2"]
    h2 = bn_relu(dot(z, p["w3"]), p["g2"], p["be2"])
    return dot(h2, p["w4"]) + p["b4"]


if __name__ == "__main__":
    key = jax.random.PRNGKey(0)
    k_x, k_p = jax.random.split(key)

    # Lane/sublane-aligned small shapes: feature dims multiples of 128,
    # batch a multiple of 16 (bf16 sublane packing); 4 batch tiles of 16.
    B, D_IN, HIDDEN, D_PROJ = 64, 128, 256, 128
    x = jax.random.normal(k_x, (B, D_IN), jnp.float32).astype(jnp.bfloat16)
    params = init_params(k_p, D_IN, HIDDEN, D_PROJ)

    out_fused = jax.block_until_ready(combined_forward(x, params))
    out_tiled = jax.block_until_ready(
        combined_forward_tiled(x, params, batch_tile=16))

    assert out_fused.shape == (B, D_PROJ)
    assert out_tiled.shape == (B, D_PROJ)

    bf16_apply = _bf16_elementwise_ok()

    # Tight check: fused kernel vs a reference that replicates its exact math
    # (no b2, same BN-apply precision).
    ref_matched = _reference(x, params, include_b2=False, bf16_apply=bf16_apply)
    err = float(jnp.max(jnp.abs(out_fused - ref_matched)))
    assert jnp.allclose(out_fused, ref_matched, atol=5e-3, rtol=5e-3), (
        f"fused vs matched reference: max abs err {err:.3e}")

    # Module-faithful check (b2 included, f32 BN apply): differences are only
    # the BN-cancelled bias and bf16 rounding points.
    ref_module = _reference(x, params, include_b2=True, bf16_apply=False)
    for name, o in (("fused", out_fused), ("tiled", out_tiled)):
        err = float(jnp.max(jnp.abs(o - ref_module)))
        assert jnp.allclose(o, ref_module, atol=5e-2, rtol=5e-2), (
            f"{name} vs module reference: max abs err {err:.3e}")

    print("KERNEL_OK")
</pallas_src>

<mosaic_0001>
module attributes {stable_mosaic.version = 11 : i64} {
  func.func @_fused_kernel(%arg0: i32, %arg1: memref<64x128xbf16, #tpu.memory_space<vmem>>, %arg2: memref<128x256xbf16, #tpu.memory_space<vmem>>, %arg3: memref<1x256xf32, #tpu.memory_space<vmem>>, %arg4: memref<1x256xf32, #tpu.memory_space<vmem>>, %arg5: memref<256x128xbf16, #tpu.memory_space<vmem>>, %arg6: memref<128x256xbf16, #tpu.memory_space<vmem>>, %arg7: memref<1x256xf32, #tpu.memory_space<vmem>>, %arg8: memref<1x256xf32, #tpu.memory_space<vmem>>, %arg9: memref<256x128xbf16, #tpu.memory_space<vmem>>, %arg10: memref<1x128xf32, #tpu.memory_space<vmem>>, %arg11: memref<64x128xf32, #tpu.memory_space<vmem>>) attributes {dimension_semantics = [#tpu.dimension_semantics<arbitrary>], iteration_bounds = array<i64: 1>, scalar_prefetch = 0 : i64, scratch_operands = 0 : i64, tpu.core_type = #tpu.core_type<tc>, window_params = [{pipeline_mode = #tpu.pipeline_mode<synchronous>, transform_indices = @transform_0, window_bounds = array<i64: 64, 128>}, {pipeline_mode = #tpu.pipeline_mode<synchronous>, transform_indices = @transform_1, window_bounds = array<i64: 128, 256>}, {pipeline_mode = #tpu.pipeline_mode<synchronous>, transform_indices = @transform_2, window_bounds = array<i64: 1, 256>}, {pipeline_mode = #tpu.pipeline_mode<synchronous>, transform_indices = @transform_3, window_bounds = array<i64: 1, 256>}, {pipeline_mode = #tpu.pipeline_mode<synchronous>, transform_indices = @transform_4, window_bounds = array<i64: 256, 128>}, {pipeline_mode = #tpu.pipeline_mode<synchronous>, transform_indices = @transform_5, window_bounds = array<i64: 128, 256>}, {pipeline_mode = #tpu.pipeline_mode<synchronous>, transform_indices = @transform_6, window_bounds = array<i64: 1, 256>}, {pipeline_mode = #tpu.pipeline_mode<synchronous>, transform_indices = @transform_7, window_bounds = array<i64: 1, 256>}, {pipeline_mode = #tpu.pipeline_mode<synchronous>, transform_indices = @transform_8, window_bounds = array<i64: 256, 128>}, {pipeline_mode = #tpu.pipeline_mode<synchronous>, transform_indices = @transform_9, window_bounds = array<i64: 1, 128>}, {pipeline_mode = #tpu.pipeline_mode<synchronous>, transform_indices = @transform_10, window_bounds = array<i64: 64, 128>}]} {
    %c0 = arith.constant 0 : index
    %c0_0 = arith.constant 0 : index
    %0 = vector.load %arg1[%c0, %c0_0] : memref<64x128xbf16, #tpu.memory_space<vmem>>, vector<64x128xbf16>
    %c0_1 = arith.constant 0 : index
    %c0_2 = arith.constant 0 : index
    %1 = vector.load %arg2[%c0_1, %c0_2] : memref<128x256xbf16, #tpu.memory_space<vmem>>, vector<128x256xbf16>
    %cst = arith.constant dense<0.000000e+00> : vector<64x256xf32>
    %2 = tpu.matmul %0, %1, %cst {dimension_numbers = #tpu.dot_dimension_numbers<[1], [0], [0], [1], [0, 0, 1, 1], [], []>} : vector<64x128xbf16>, vector<128x256xbf16>, vector<64x256xf32> -> vector<64x256xf32>
    %c0_3 = arith.constant 0 : index
    %c0_4 = arith.constant 0 : index
    %3 = vector.load %arg3[%c0_3, %c0_4] : memref<1x256xf32, #tpu.memory_space<vmem>>, vector<1x256xf32>
    %c0_5 = arith.constant 0 : index
    %c0_6 = arith.constant 0 : index
    %4 = vector.load %arg4[%c0_5, %c0_6] : memref<1x256xf32, #tpu.memory_space<vmem>>, vector<1x256xf32>
    %cst_7 = arith.constant dense<0.000000e+00> : vector<256xf32>
    %5 = vector.multi_reduction <add>, %2, %cst_7 [0] : vector<64x256xf32> to vector<256xf32>
    %6 = vector.shape_cast %5 : vector<256xf32> to vector<1x256xf32>
    %cst_8 = arith.constant 6.400000e+01 : f32
    %7 = vector.broadcast %cst_8 : f32 to vector<1x256xf32>
    %8 = arith.divf %6, %7 : vector<1x256xf32>
    %9 = vector.broadcast %8 : vector<1x256xf32> to vector<64x256xf32>
    %10 = arith.subf %2, %9 : vector<64x256xf32>
    %11 = arith.mulf %10, %10 : vector<64x256xf32>
    %cst_9 = arith.constant dense<0.000000e+00> : vector<256xf32>
    %12 = vector.multi_reduction <add>, %11, %cst_9 [0] : vector<64x256xf32> to vector<256xf32>
    %13 = vector.shape_cast %12 : vector<256xf32> to vector<1x256xf32>
    %cst_10 = arith.constant 6.400000e+01 : f32
    %14 = vector.broadcast %cst_10 : f32 to vector<1x256xf32>
    %15 = arith.divf %13, %14 : vector<1x256xf32>
    %cst_11 = arith.constant 9.99999974E-6 : f32
    %16 = vector.broadcast %cst_11 : f32 to vector<1x256xf32>
    %17 = arith.addf %15, %16 : vector<1x256xf32>
    %18 = math.rsqrt %17 : vector<1x256xf32>
    %19 = arith.mulf %18, %3 : vector<1x256xf32>
    %20 = vector.broadcast %19 : vector<1x256xf32> to vector<64x256xf32>
    %21 = arith.mulf %10, %20 : vector<64x256xf32>
    %22 = vector.broadcast %4 : vector<1x256xf32> to vector<64x256xf32>
    %23 = arith.addf %21, %22 : vector<64x256xf32>
    %cst_12 = arith.constant 0.000000e+00 : f32
    %24 = vector.broadcast %cst_12 : f32 to vector<64x256xf32>
    %25 = arith.maximumf %23, %24 : vector<64x256xf32>
    %26 = arith.truncf %25 : vector<64x256xf32> to vector<64x256xbf16>
    %c0_13 = arith.constant 0 : index
    %c0_14 = arith.constant 0 : index
    %27 = vector.load %arg5[%c0_13, %c0_14] : memref<256x128xbf16, #tpu.memory_space<vmem>>, vector<256x128xbf16>
    %cst_15 = arith.constant dense<0.000000e+00> : vector<64x128xf32>
    %28 = tpu.matmul %26, %27, %cst_15 {dimension_numbers = #tpu.dot_dimension_numbers<[1], [0], [0], [1], [0, 0, 1, 1], [], []>} : vector<64x256xbf16>, vector<256x128xbf16>, vector<64x128xf32> -> vector<64x128xf32>
    %29 = arith.truncf %28 : vector<64x128xf32> to vector<64x128xbf16>
    %c0_16 = arith.constant 0 : index
    %c0_17 = arith.constant 0 : index
    %30 = vector.load %arg6[%c0_16, %c0_17] : memref<128x256xbf16, #tpu.memory_space<vmem>>, vector<128x256xbf16>
    %cst_18 = arith.constant dense<0.000000e+00> : vector<64x256xf32>
    %31 = tpu.matmul %29, %30, %cst_18 {dimension_numbers = #tpu.dot_dimension_numbers<[1], [0], [0], [1], [0, 0, 1, 1], [], []>} : vector<64x128xbf16>, vector<128x256xbf16>, vector<64x256xf32> -> vector<64x256xf32>
    %c0_19 = arith.constant 0 : index
    %c0_20 = arith.constant 0 : index
    %32 = vector.load %arg7[%c0_19, %c0_20] : memref<1x256xf32, #tpu.memory_space<vmem>>, vector<1x256xf32>
    %c0_21 = arith.constant 0 : index
    %c0_22 = arith.constant 0 : index
    %33 = vector.load %arg8[%c0_21, %c0_22] : memref<1x256xf32, #tpu.memory_space<vmem>>, vector<1x256xf32>
    %cst_23 = arith.constant dense<0.000000e+00> : vector<256xf32>
    %34 = vector.multi_reduction <add>, %31, %cst_23 [0] : vector<64x256xf32> to vector<256xf32>
    %35 = vector.shape_cast %34 : vector<256xf32> to vector<1x256xf32>
    %cst_24 = arith.constant 6.400000e+01 : f32
    %36 = vector.broadcast %cst_24 : f32 to vector<1x256xf32>
    %37 = arith.divf %35, %36 : vector<1x256xf32>
    %38 = vector.broadcast %37 : vector<1x256xf32> to vector<64x256xf32>
    %39 = arith.subf %31, %38 : vector<64x256xf32>
    %40 = arith.mulf %39, %39 : vector<64x256xf32>
    %cst_25 = arith.constant dense<0.000000e+00> : vector<256xf32>
    %41 = vector.multi_reduction <add>, %40, %cst_25 [0] : vector<64x256xf32> to vector<256xf32>
    %42 = vector.shape_cast %41 : vector<256xf32> to vector<1x256xf32>
    %cst_26 = arith.constant 6.400000e+01 : f32
    %43 = vector.broadcast %cst_26 : f32 to vector<1x256xf32>
    %44 = arith.divf %42, %43 : vector<1x256xf32>
    %cst_27 = arith.constant 9.99999974E-6 : f32
    %45 = vector.broadcast %cst_27 : f32 to vector<1x256xf32>
    %46 = arith.addf %44, %45 : vector<1x256xf32>
    %47 = math.rsqrt %46 : vector<1x256xf32>
    %48 = arith.mulf %47, %32 : vector<1x256xf32>
    %49 = vector.broadcast %48 : vector<1x256xf32> to vector<64x256xf32>
    %50 = arith.mulf %39, %49 : vector<64x256xf32>
    %51 = vector.broadcast %33 : vector<1x256xf32> to vector<64x256xf32>
    %52 = arith.addf %50, %51 : vector<64x256xf32>
    %cst_28 = arith.constant 0.000000e+00 : f32
    %53 = vector.broadcast %cst_28 : f32 to vector<64x256xf32>
    %54 = arith.maximumf %52, %53 : vector<64x256xf32>
    %55 = arith.truncf %54 : vector<64x256xf32> to vector<64x256xbf16>
    %c0_29 = arith.constant 0 : index
    %c0_30 = arith.constant 0 : index
    %56 = vector.load %arg9[%c0_29, %c0_30] : memref<256x128xbf16, #tpu.memory_space<vmem>>, vector<256x128xbf16>
    %cst_31 = arith.constant dense<0.000000e+00> : vector<64x128xf32>
    %57 = tpu.matmul %55, %56, %cst_31 {dimension_numbers = #tpu.dot_dimension_numbers<[1], [0], [0], [1], [0, 0, 1, 1], [], []>} : vector<64x256xbf16>, vector<256x128xbf16>, vector<64x128xf32> -> vector<64x128xf32>
    %c0_32 = arith.constant 0 : index
    %c0_33 = arith.constant 0 : index
    %58 = vector.load %arg10[%c0_32, %c0_33] : memref<1x128xf32, #tpu.memory_space<vmem>>, vector<1x128xf32>
    %59 = vector.broadcast %58 : vector<1x128xf32> to vector<64x128xf32>
    %60 = arith.addf %57, %59 : vector<64x128xf32>
    %c0_34 = arith.constant 0 : index
    %c0_35 = arith.constant 0 : index
    %61 = vector.load %arg11[%c0_34, %c0_35] : memref<64x128xf32, #tpu.memory_space<vmem>>, vector<64x128xf32>
    tpu.vector_store %arg11[%c0_34, %c0_35], %60 {strides = array<i32>} : memref<64x128xf32, #tpu.memory_space<vmem>>, vector<64x128xf32>,
    return
  }
  func.func @transform_0(%arg0: i32) -> (i32, i32) {
    %c0_i32 = arith.constant 0 : i32
    %c0_i32_0 = arith.constant 0 : i32
    %c0_i32_1 = arith.constant 0 : i32
    return %c0_i32, %c0_i32_0 : i32, i32
  }
  func.func @transform_1(%arg0: i32) -> (i32, i32) {
    %c0_i32 = arith.constant 0 : i32
    %c0_i32_0 = arith.constant 0 : i32
    %c0_i32_1 = arith.constant 0 : i32
    return %c0_i32, %c0_i32_0 : i32, i32
  }
  func.func @transform_2(%arg0: i32) -> (i32, i32) {
    %c0_i32 = arith.constant 0 : i32
    %c0_i32_0 = arith.constant 0 : i32
    %c0_i32_1 = arith.constant 0 : i32
    return %c0_i32, %c0_i32_0 : i32, i32
  }
  func.func @transform_3(%arg0: i32) -> (i32, i32) {
    %c0_i32 = arith.constant 0 : i32
    %c0_i32_0 = arith.constant 0 : i32
    %c0_i32_1 = arith.constant 0 : i32
    return %c0_i32, %c0_i32_0 : i32, i32
  }
  func.func @transform_4(%arg0: i32) -> (i32, i32) {
    %c0_i32 = arith.constant 0 : i32
    %c0_i32_0 = arith.constant 0 : i32
    %c0_i32_1 = arith.constant 0 : i32
    return %c0_i32, %c0_i32_0 : i32, i32
  }
  func.func @transform_5(%arg0: i32) -> (i32, i32) {
    %c0_i32 = arith.constant 0 : i32
    %c0_i32_0 = arith.constant 0 : i32
    %c0_i32_1 = arith.constant 0 : i32
    return %c0_i32, %c0_i32_0 : i32, i32
  }
  func.func @transform_6(%arg0: i32) -> (i32, i32) {
    %c0_i32 = arith.constant 0 : i32
    %c0_i32_0 = arith.constant 0 : i32
    %c0_i32_1 = arith.constant 0 : i32
    return %c0_i32, %c0_i32_0 : i32, i32
  }
  func.func @transform_7(%arg0: i32) -> (i32, i32) {
    %c0_i32 = arith.constant 0 : i32
    %c0_i32_0 = arith.constant 0 : i32
    %c0_i32_1 = arith.constant 0 : i32
    return %c0_i32, %c0_i32_0 : i32, i32
  }
  func.func @transform_8(%arg0: i32) -> (i32, i32) {
    %c0_i32 = arith.constant 0 : i32
    %c0_i32_0 = arith.constant 0 : i32
    %c0_i32_1 = arith.constant 0 : i32
    return %c0_i32, %c0_i32_0 : i32, i32
  }
  func.func @transform_9(%arg0: i32) -> (i32, i32) {
    %c0_i32 = arith.constant 0 : i32
    %c0_i32_0 = arith.constant 0 : i32
    %c0_i32_1 = arith.constant 0 : i32
    return %c0_i32, %c0_i32_0 : i32, i32
  }
  func.func @transform_10(%arg0: i32) -> (i32, i32) {
    %c0_i32 = arith.constant 0 : i32
    %c0_i32_0 = arith.constant 0 : i32
    %c0_i32_1 = arith.constant 0 : i32
    return %c0_i32, %c0_i32_0 : i32, i32
  }
}

</mosaic_0001>

<llo_original>
// kernel: tpu_custom_call.1
$region0: #{tpu_custom_call.1}
  #allocation0 [shape = 'u32[]', space=smem, size = 0x4, offset = 0x4, fixed_abs, tag = 'smem constant byte address 0x4 - core index']
  #allocation1 [shape = 'u32[144,128]{1,0:T(1,128)}', space=vmem, size = 0x12000, scoped, tag = 'internal scratch']
  %s0 = inlined_call_operand.hbm [shape: bf16[64,128], index: 0, kind: input, shape index: {}]
  %s1 = inlined_call_operand.hbm [shape: bf16[128,256], index: 1, kind: input, shape index: {}]
  %s2 = inlined_call_operand.vmem [shape: f32[1,256], index: 2, kind: input, shape index: {}]
  %s3 = inlined_call_operand.vmem [shape: f32[1,256], index: 3, kind: input, shape index: {}]
  %s4 = inlined_call_operand.hbm [shape: bf16[256,128], index: 4, kind: input, shape index: {}]
  %s5 = inlined_call_operand.hbm [shape: bf16[128,256], index: 5, kind: input, shape index: {}]
  %s6 = inlined_call_operand.vmem [shape: f32[1,256], index: 6, kind: input, shape index: {}]
  %s7 = inlined_call_operand.vmem [shape: f32[1,256], index: 7, kind: input, shape index: {}]
  %s8 = inlined_call_operand.hbm [shape: bf16[256,128], index: 8, kind: input, shape index: {}]
  %s9 = inlined_call_operand.vmem [shape: f32[1,128], index: 9, kind: input, shape index: {}]
  %s10 = inlined_call_operand.hbm [shape: f32[64,128], index: 10, kind: output, shape index: {}]
  %s11 = sld [smem:[#allocation0]]
  $region70: #{tpu_custom_call.1} parent=0
    _
  %s13 = ssub.s32 1, %s11
  %s14 = scalar_select 0, %s13, %s11
  $region1: #{tpu_custom_call.1} parent=0
    #allocation2 [shape = 'u8[16384]{0}', space=vmem, size = 0x4000, scoped, tag = 'input window, operand 0, single buffered']
    #allocation3 [shape = 's32[1]{0}', space=sflag, size = 0x4, scoped, tag = 'scoped memory for tpu_custom_call.1']
    #allocation4 [shape = 's32[1]{0}', space=sflag, size = 0x4, scoped, tag = 'scoped memory for tpu_custom_call.1']
    #allocation5 [shape = 'u8[65536]{0}', space=vmem, size = 0x10000, scoped, tag = 'input window, operand 1, single buffered']
    #allocation6 [shape = 's32[1]{0}', space=sflag, size = 0x4, scoped, tag = 'scoped memory for tpu_custom_call.1']
    #allocation7 [shape = 'u8[65536]{0}', space=vmem, size = 0x10000, scoped, tag = 'input window, operand 4, single buffered']
    #allocation8 [shape = 'u8[65536]{0}', space=vmem, size = 0x10000, scoped, tag = 'input window, operand 5, single buffered']
    #allocation9 [shape = 's32[1]{0}', space=sflag, size = 0x4, scoped, tag = 'scoped memory for tpu_custom_call.1']
    #allocation10 [shape = 'u8[65536]{0}', space=vmem, size = 0x10000, scoped, tag = 'input window, operand 8, single buffered']
    #allocation11 [shape = 'u8[32768]{0}', space=vmem, size = 0x8000, scoped, tag = 'output window, operand 0, single buffered']
    %15 = vsyncpa [#allocation3], 0
    %16 = vsyncpa [#allocation6], 0
    %17 = vsyncpa [#allocation9], 0
    %18 = vsyncpa [#allocation4], 0
    // Predicated region
    $region2: #{tpu_custom_call.1} parent=1 // pred_check
      _
    $region3: #{tpu_custom_call.1} parent=1 // pred_check_branch
      %20 = sbr.rel (0) target = $region5
    $region4: #{tpu_custom_call.1} parent=1 // pred_region
      %s22 = ssub.s32 512, 512
      %23 = vsyncadd [#allocation3], %s22
      %s24 = sshll.u32 [#allocation2], 4
      %s25 = int_to_ptr.vmem [resolvable:$true] %s24
      %30 = dma.hbm_to_vmem [thread:$0]  %s0, 512, %s25, [#allocation3], 64, 64, 4
    $region5: #{tpu_custom_call.1} parent=1 // pred_fallthru
      _
    // Predicated region
    $region6: #{tpu_custom_call.1} parent=1 // pred_check
      _
    $region7: #{tpu_custom_call.1} parent=1 // pred_check_branch
      %32 = sbr.rel (0) target = $region9
    $region8: #{tpu_custom_call.1} parent=1 // pred_region
      %s34 = ssub.s32 2048, 2048
      %35 = vsyncadd [#allocation6], %s34
      %s36 = sshll.u32 [#allocation5], 4
      %s37 = int_to_ptr.vmem [resolvable:$true] %s36
      %42 = dma.hbm_to_vmem [thread:$0]  %s1, 2048, %s37, [#allocation6], 128, 128, 8
    $region9: #{tpu_custom_call.1} parent=1 // pred_fallthru
      _
    // Predicated region
    $region10: #{tpu_custom_call.1} parent=1 // pred_check
      _
    $region11: #{tpu_custom_call.1} parent=1 // pred_check_branch
      %44 = sbr.rel (0) target = $region13
    $region12: #{tpu_custom_call.1} parent=1 // pred_region
      _
    $region13: #{tpu_custom_call.1} parent=1 // pred_fallthru
      _
    // Predicated region
    $region14: #{tpu_custom_call.1} parent=1 // pred_check
      _
    $region15: #{tpu_custom_call.1} parent=1 // pred_check_branch
      %46 = sbr.rel (0) target = $region17
    $region16: #{tpu_custom_call.1} parent=1 // pred_region
      _
    $region17: #{tpu_custom_call.1} parent=1 // pred_fallthru
      _
    // Predicated region
    $region18: #{tpu_custom_call.1} parent=1 // pred_check
      _
    $region19: #{tpu_custom_call.1} parent=1 // pred_check_branch
      %48 = sbr.rel (0) target = $region21
    $region20: #{tpu_custom_call.1} parent=1 // pred_region
      %s50 = ssub.s32 2048, 2048
      %51 = vsyncadd [#allocation6], %s50
      %s52 = sshll.u32 [#allocation7], 4
      %s53 = int_to_ptr.vmem [resolvable:$true] %s52
      %58 = dma.hbm_to_vmem [thread:$0]  %s4, 2048, %s53, [#allocation6], 64, 64, 4
    $region21: #{tpu_custom_call.1} parent=1 // pred_fallthru
      _
    // Predicated region
    $region22: #{tpu_custom_call.1} parent=1 // pred_check
      _
    $region23: #{tpu_custom_call.1} parent=1 // pred_check_branch
      %60 = sbr.rel (0) target = $region25
    $region24: #{tpu_custom_call.1} parent=1 // pred_region
      %s62 = ssub.s32 2048, 2048
      %63 = vsyncadd [#allocation9], %s62
      %s64 = sshll.u32 [#allocation8], 4
      %s65 = int_to_ptr.vmem [resolvable:$true] %s64
      %70 = dma.hbm_to_vmem [thread:$0]  %s5, 2048, %s65, [#allocation9], 128, 128, 8
    $region25: #{tpu_custom_call.1} parent=1 // pred_fallthru
      _
    // Predicated region
    $region26: #{tpu_custom_call.1} parent=1 // pred_check
      _
    $region27: #{tpu_custom_call.1} parent=1 // pred_check_branch
      %72 = sbr.rel (0) target = $region29
    $region28: #{tpu_custom_call.1} parent=1 // pred_region
      _
    $region29: #{tpu_custom_call.1} parent=1 // pred_fallthru
      _
    // Predicated region
    $region30: #{tpu_custom_call.1} parent=1 // pred_check
      _
    $region31: #{tpu_custom_call.1} parent=1 // pred_check_branch
      %74 = sbr.rel (0) target = $region33
    $region32: #{tpu_custom_call.1} parent=1 // pred_region
      _
    $region33: #{tpu_custom_call.1} parent=1 // pred_fallthru
      _
    // Predicated region
    $region34: #{tpu_custom_call.1} parent=1 // pred_check
      _
    $region35: #{tpu_custom_call.1} parent=1 // pred_check_branch
      %76 = sbr.rel (0) target = $region37
    $region36: #{tpu_custom_call.1} parent=1 // pred_region
      %s78 = ssub.s32 2048, 2048
      %79 = vsyncadd [#allocation9], %s78
      %s80 = sshll.u32 [#allocation10], 4
      %s81 = int_to_ptr.vmem [resolvable:$true] %s80
      %86 = dma.hbm_to_vmem [thread:$0]  %s8, 2048, %s81, [#allocation9], 64, 64, 4
    $region37: #{tpu_custom_call.1} parent=1 // pred_fallthru
      _
    // Predicated region
    $region38: #{tpu_custom_call.1} parent=1 // pred_check
      _
    $region39: #{tpu_custom_call.1} parent=1 // pred_check_branch
      %88 = sbr.rel (0) target = $region41
    $region40: #{tpu_custom_call.1} parent=1 // pred_region
      _
    $region41: #{tpu_custom_call.1} parent=1 // pred_fallthru
      _
    // Predicated region
    $region42: #{tpu_custom_call.1} parent=1 // pred_check
      _
    $region43: #{tpu_custom_call.1} parent=1 // pred_check_branch
      %90 = sbr.rel (0) target = $region45
    $region44: #{tpu_custom_call.1} parent=1 // pred_region
      %91 = dma.done [#allocation3], 512
    $region45: #{tpu_custom_call.1} parent=1 // pred_fallthru
      _
    // Predicated region
    $region46: #{tpu_custom_call.1} parent=1 // pred_check
      _
    $region47: #{tpu_custom_call.1} parent=1 // pred_check_branch
      %93 = sbr.rel (0) target = $region49
    $region48: #{tpu_custom_call.1} parent=1 // pred_region
      %94 = dma.done [#allocation6], 2048
    $region49: #{tpu_custom_call.1} parent=1 // pred_fallthru
      _
    // Predicated region
    $region50: #{tpu_custom_call.1} parent=1 // pred_check
      _
    $region51: #{tpu_custom_call.1} parent=1 // pred_check_branch
      %96 = sbr.rel (0) target = $region53
    $region52: #{tpu_custom_call.1} parent=1 // pred_region
      %97 = dma.done [#allocation6], 2048
    $region53: #{tpu_custom_call.1} parent=1 // pred_fallthru
      _
    // Predicated region
    $region54: #{tpu_custom_call.1} parent=1 // pred_check
      _
    $region55: #{tpu_custom_call.1} parent=1 // pred_check_branch
      %99 = sbr.rel (0) target = $region57
    $region56: #{tpu_custom_call.1} parent=1 // pred_region
      %100 = dma.done [#allocation9], 2048
    $region57: #{tpu_custom_call.1} parent=1 // pred_fallthru
      _
    // Predicated region
    $region58: #{tpu_custom_call.1} parent=1 // pred_check
      _
    $region59: #{tpu_custom_call.1} parent=1 // pred_check_branch
      %102 = sbr.rel (0) target = $region61
    $region60: #{tpu_custom_call.1} parent=1 // pred_region
      %103 = dma.done [#allocation9], 2048
    $region61: #{tpu_custom_call.1} parent=1 // pred_fallthru
      _
    %v105 = vld [vmem:[#allocation2] sm:$0xf]
    %v106 = vld [vmem:[#allocation2 + $0x4] sm:$0xf]
    %v107 = vld [vmem:[#allocation2 + $0x8] sm:$0xf]
    %v108 = vld [vmem:[#allocation2 + $0xc] sm:$0xf]
    %v109 = vld [vmem:[#allocation2 + $0x10] sm:$0xf]
    %v110 = vld [vmem:[#allocation2 + $0x14] sm:$0xf]
    %v111 = vld [vmem:[#allocation2 + $0x18] sm:$0xf]
    %v112 = vld [vmem:[#allocation2 + $0x1c] sm:$0xf]
    %v113 = vld [vmem:[#allocation5] sm:$0xff]
    %v114 = vld [vmem:[#allocation5 + $0x8] sm:$0xff]
    %v115 = vld [vmem:[#allocation5 + $0x10] sm:$0xff]
    %v116 = vld [vmem:[#allocation5 + $0x18] sm:$0xff]
    %v117 = vld [vmem:[#allocation5 + $0x20] sm:$0xff]
    %v118 = vld [vmem:[#allocation5 + $0x28] sm:$0xff]
    %v119 = vld [vmem:[#allocation5 + $0x30] sm:$0xff]
    %v120 = vld [vmem:[#allocation5 + $0x38] sm:$0xff]
    %v121 = vld [vmem:[#allocation5 + $0x40] sm:$0xff]
    %v122 = vld [vmem:[#allocation5 + $0x48] sm:$0xff]
    %v123 = vld [vmem:[#allocation5 + $0x50] sm:$0xff]
    %v124 = vld [vmem:[#allocation5 + $0x58] sm:$0xff]
    %v125 = vld [vmem:[#allocation5 + $0x60] sm:$0xff]
    %v126 = vld [vmem:[#allocation5 + $0x68] sm:$0xff]
    %v127 = vld [vmem:[#allocation5 + $0x70] sm:$0xff]
    %v128 = vld [vmem:[#allocation5 + $0x78] sm:$0xff]
    %v137 = vunpack.c.l.b16 %v105
    %v138 = vunpack.c.l.b16 %v106
    %v139 = vunpack.c.l.b16 %v107
    %v140 = vunpack.c.l.b16 %v108
    %v141 = vunpack.c.l.b16 %v109
    %v142 = vunpack.c.l.b16 %v110
    %v143 = vunpack.c.l.b16 %v111
    %v144 = vunpack.c.l.b16 %v112
    %v145 = vpack.c.b16 %v138, %v137
    %v146 = vpack.c.b16 %v140, %v139
    %v147 = vpack.c.b16 %v142, %v141
    %v148 = vpack.c.b16 %v144, %v143
    %v169 = vunpack.c.l.b16 %v113
    %v170 = vunpack.c.h.b16 %v113
    %v171 = vunpack.c.l.b16 %v114
    %v172 = vunpack.c.h.b16 %v114
    %v173 = vunpack.c.l.b16 %v115
    %v174 = vunpack.c.h.b16 %v115
    %v175 = vunpack.c.l.b16 %v116
    %v176 = vunpack.c.h.b16 %v116
    %v177 = vunpack.c.l.b16 %v117
    %v178 = vunpack.c.h.b16 %v117
    %v179 = vunpack.c.l.b16 %v118
    %v180 = vunpack.c.h.b16 %v118
    %v181 = vunpack.c.l.b16 %v119
    %v182 = vunpack.c.h.b16 %v119
    %v183 = vunpack.c.l.b16 %v120
    %v184 = vunpack.c.h.b16 %v120
    %v185 = vunpack.c.l.b16 %v121
    %v186 = vunpack.c.h.b16 %v121
    %v187 = vunpack.c.l.b16 %v122
    %v188 = vunpack.c.h.b16 %v122
    %v189 = vunpack.c.l.b16 %v123
    %v190 = vunpack.c.h.b16 %v123
    %v191 = vunpack.c.l.b16 %v124
    %v192 = vunpack.c.h.b16 %v124
    %v193 = vunpack.c.l.b16 %v125
    %v194 = vunpack.c.h.b16 %v125
    %v195 = vunpack.c.l.b16 %v126
    %v196 = vunpack.c.h.b16 %v126
    %v197 = vunpack.c.l.b16 %v127
    %v198 = vunpack.c.h.b16 %v127
    %v199 = vunpack.c.l.b16 %v128
    %v200 = vunpack.c.h.b16 %v128
    %v201 = vpack.c.b16 %v171, %v169
    %v202 = vpack.c.b16 %v172, %v170
    %v203 = vpack.c.b16 %v175, %v173
    %v204 = vpack.c.b16 %v176, %v174
    %v205 = vpack.c.b16 %v179, %v177
    %v206 = vpack.c.b16 %v180, %v178
    %v207 = vpack.c.b16 %v183, %v181
    %v208 = vpack.c.b16 %v184, %v182
    %v209 = vpack.c.b16 %v187, %v185
    %v210 = vpack.c.b16 %v188, %v186
    %v211 = vpack.c.b16 %v191, %v189
    %v212 = vpack.c.b16 %v192, %v190
    %v213 = vpack.c.b16 %v195, %v193
    %v214 = vpack.c.b16 %v196, %v194
    %v215 = vpack.c.b16 %v199, %v197
    %v216 = vpack.c.b16 %v200, %v198
    %233 = vmatprep.subr.bf16.mxu0 %v216
    %234 = vmatpush1.bf16.msra.mxu0 %v215
    %235 = vmatprep.subr.bf16.mxu0 %v214
    %236 = vmatpush1.bf16.msra.mxu0 %v213
    %237 = vmatprep.subr.bf16.mxu0 %v212
    %238 = vmatpush1.bf16.msra.mxu0 %v211
    %239 = vmatprep.subr.bf16.mxu0 %v210
    %240 = vmatpush1.bf16.msra.mxu0 %v209
    %241 = vmatprep.subr.bf16.mxu0 %v208
    %242 = vmatpush1.bf16.msra.mxu0 %v207
    %243 = vmatprep.subr.bf16.mxu0 %v206
    %244 = vmatpush1.bf16.msra.mxu0 %v205
    %245 = vmatprep.subr.bf16.mxu0 %v204
    %246 = vmatpush1.bf16.msra.mxu0 %v203
    %247 = vmatprep.subr.bf16.mxu0 %v202
    %248 = vmatpush1.bf16.msra.mxu0 %v201
    %249 = vmatprep.subr.bf16.mxu0 0
    %250 = vmatpush2.bf16.msra.mxu0 0
    %251 = vmatprep.subr.bf16.mxu0 0
    %252 = vmatpush2.bf16.msra.mxu0 0
    %253 = vmatprep.subr.bf16.mxu0 0
    %254 = vmatpush2.bf16.msra.mxu0 0
    %255 = vmatprep.subr.bf16.mxu0 0
    %256 = vmatpush2.bf16.msra.mxu0 0
    %257 = vmatprep.subr.bf16.mxu0 0
    %258 = vmatpush2.bf16.msra.mxu0 0
    %259 = vmatprep.subr.bf16.mxu0 0
    %260 = vmatpush2.bf16.msra.mxu0 0
    %261 = vmatprep.subr.bf16.mxu0 0
    %262 = vmatpush2.bf16.msra.mxu0 0
    %263 = vmatprep.subr.bf16.mxu0 0
    %264 = vmatpush2.bf16.msra.mxu0 0
    %265 = vmatprep.mubr.bf16.mxu0 0
    %266 = vmatmul.mubr.bf16.gmra.mxu0 %v145
    %v267 = vpop.f32.mrf.mxu0
    %v268 = vadd.f32 0.0, %v267
    %v269 = vpop.f32.mrf.mxu0
    %v270 = vadd.f32 0.0, %v269
    %v271 = vpop.f32.mrf.mxu0
    %v272 = vadd.f32 0.0, %v271
    %v273 = vpop.f32.mrf.mxu0
    %v274 = vadd.f32 0.0, %v273
    %275 = vmatprep.mubr.bf16.mxu0 0
    %276 = vmatmul.mubr.bf16.gmra.mxu0 %v146
    %v277 = vpop.f32.mrf.mxu0
    %v278 = vadd.f32 0.0, %v277
    %v279 = vpop.f32.mrf.mxu0
    %v280 = vadd.f32 0.0, %v279
    %v281 = vpop.f32.mrf.mxu0
    %v282 = vadd.f32 0.0, %v281
    %v283 = vpop.f32.mrf.mxu0
    %v284 = vadd.f32 0.0, %v283
    %285 = vmatprep.mubr.bf16.mxu0 0
    %286 = vmatmul.mubr.bf16.gmra.mxu0 %v147
    %v287 = vpop.f32.mrf.mxu0
    %v288 = vadd.f32 0.0, %v287
    %v289 = vpop.f32.mrf.mxu0
    %v290 = vadd.f32 0.0, %v289
    %v291 = vpop.f32.mrf.mxu0
    %v292 = vadd.f32 0.0, %v291
    %v293 = vpop.f32.mrf.mxu0
    %v294 = vadd.f32 0.0, %v293
    %295 = vmatprep.mubr.bf16.mxu0 0
    %296 = vmatmul.mubr.bf16.gmra.mxu0 %v148
    %v297 = vpop.f32.mrf.mxu0
    %v298 = vadd.f32 0.0, %v297
    %v299 = vpop.f32.mrf.mxu0
    %v300 = vadd.f32 0.0, %v299
    %v301 = vpop.f32.mrf.mxu0
    %v302 = vadd.f32 0.0, %v301
    %v303 = vpop.f32.mrf.mxu0
    %v304 = vadd.f32 0.0, %v303
    %305 = vdwg.mxu0
    %v306 = vld [vmem:[%s2] sm:$0x3]
    %v307 = vld [vmem:[%s3] sm:$0x3]
    %v308 = vadd.f32 %v268, %v272
    %v309 = vadd.f32 %v308, %v278
    %v310 = vadd.f32 %v309, %v282
    %v311 = vadd.f32 %v310, %v288
    %v312 = vadd.f32 %v311, %v292
    %v313 = vadd.f32 %v312, %v298
    %v314 = vadd.f32 %v313, %v302
    %v315 = vrot.slane %v314, 4
    %v316 = vadd.f32 %v314, %v315
    %v317 = vrot.slane %v316, 2
    %v318 = vadd.f32 %v316, %v317
    %v319 = vrot.slane %v318, 1
    %v320 = vadd.f32 %v318, %v319
    %v321 = vadd.f32 %v270, %v274
    %v322 = vadd.f32 %v321, %v280
    %v323 = vadd.f32 %v322, %v284
    %v324 = vadd.f32 %v323, %v290
    %v325 = vadd.f32 %v324, %v294
    %v326 = vadd.f32 %v325, %v300
    %v327 = vadd.f32 %v326, %v304
    %v328 = vrot.slane %v327, 4
    %v329 = vadd.f32 %v327, %v328
    %v330 = vrot.slane %v329, 2
    %v331 = vadd.f32 %v329, %v330
    %v332 = vrot.slane %v331, 1
    %v333 = vadd.f32 %v331, %v332
    %v334 = vrcp.pop 64.0
    %v335 = vmul.f32 %v320, %v334
    %v336 = vmul.f32 %v333, %v334
    %v337 = vsub.f32 %v268, %v335
    %v338 = vsub.f32 %v270, %v336
    %v339 = vsub.f32 %v272, %v335
    %v340 = vsub.f32 %v274, %v336
    %v341 = vsub.f32 %v278, %v335
    %v342 = vsub.f32 %v280, %v336
    %v343 = vsub.f32 %v282, %v335
    %v344 = vsub.f32 %v284, %v336
    %v345 = vsub.f32 %v288, %v335
    %v346 = vsub.f32 %v290, %v336
    %v347 = vsub.f32 %v292, %v335
    %v348 = vsub.f32 %v294, %v336
    %v349 = vsub.f32 %v298, %v335
    %v350 = vsub.f32 %v300, %v336
    %v351 = vsub.f32 %v302, %v335
    %v352 = vsub.f32 %v304, %v336
    %v353 = vmul.f32 %v337, %v337
    %v354 = vmul.f32 %v338, %v338
    %v355 = vmul.f32 %v339, %v339
    %v356 = vmul.f32 %v340, %v340
    %v357 = vmul.f32 %v341, %v341
    %v358 = vmul.f32 %v342, %v342
    %v359 = vmul.f32 %v343, %v343
    %v360 = vmul.f32 %v344, %v344
    %v361 = vmul.f32 %v345, %v345
    %v362 = vmul.f32 %v346, %v346
    %v363 = vmul.f32 %v347, %v347
    %v364 = vmul.f32 %v348, %v348
    %v365 = vmul.f32 %v349, %v349
    %v366 = vmul.f32 %v350, %v350
    %v367 = vmul.f32 %v351, %v351
    %v368 = vmul.f32 %v352, %v352
    %v369 = vadd.f32 %v353, %v355
    %v370 = vadd.f32 %v369, %v357
    %v371 = vadd.f32 %v370, %v359
    %v372 = vadd.f32 %v371, %v361
    %v373 = vadd.f32 %v372, %v363
    %v374 = vadd.f32 %v373, %v365
    %v375 = vadd.f32 %v374, %v367
    %v376 = vrot.slane %v375, 4
    %v377 = vadd.f32 %v375, %v376
    %v378 = vrot.slane %v377, 2
    %v379 = vadd.f32 %v377, %v378
    %v380 = vrot.slane %v379, 1
    %v381 = vadd.f32 %v379, %v380
    %v382 = vadd.f32 %v354, %v356
    %v383 = vadd.f32 %v382, %v358
    %v384 = vadd.f32 %v383, %v360
    %v385 = vadd.f32 %v384, %v362
    %v386 = vadd.f32 %v385, %v364
    %v387 = vadd.f32 %v386, %v366
    %v388 = vadd.f32 %v387, %v368
    %v389 = vrot.slane %v388, 4
    %v390 = vadd.f32 %v388, %v389
    %v391 = vrot.slane %v390, 2
    %v392 = vadd.f32 %v390, %v391
    %v393 = vrot.slane %v392, 1
    %v394 = vadd.f32 %v392, %v393
    %v395 = vmul.f32 %v381, %v334
    %v396 = vmul.f32 %v394, %v334
    %v397 = vadd.f32 %v395, 1e-05
    %v398 = vadd.f32 %v396, 1e-05
    %v399 = vrsqrt.pop %v397
    %v400 = vrsqrt.pop %v398
    %v402 = vlaneseq
    %v403 = vshrl.u32 %v402, 7
    %v404 = vsub.s32 0, %v403
    %v405 = vrot.slane %v306, %v404
    %v406 = vlaneseq
    %v407 = vshrl.u32 %v406, 7
    %v408 = vsub.s32 1, %v407
    %v409 = vrot.slane %v306, %v408
    %v412 = vmul.f32 %v399, %v405
    %v413 = vmul.f32 %v400, %v409
    %v414 = vlaneseq
    %v415 = vshrl.u32 %v414, 7
    %v416 = vsub.s32 0, %v415
    %v417 = vrot.slane %v412, %v416
    %v418 = vlaneseq
    %v419 = vshrl.u32 %v418, 7
    %v420 = vsub.s32 0, %v419
    %v421 = vrot.slane %v413, %v420
    %v422 = vmul.f32 %v337, %v417
    %v423 = vmul.f32 %v338, %v421
    %v424 = vmul.f32 %v339, %v417
    %v425 = vmul.f32 %v340, %v421
    %v426 = vmul.f32 %v341, %v417
    %v427 = vmul.f32 %v342, %v421
    %v428 = vmul.f32 %v343, %v417
    %v429 = vmul.f32 %v344, %v421
    %v430 = vmul.f32 %v345, %v417
    %v431 = vmul.f32 %v346, %v421
    %v432 = vmul.f32 %v347, %v417
    %v433 = vmul.f32 %v348, %v421
    %v434 = vmul.f32 %v349, %v417
    %v435 = vmul.f32 %v350, %v421
    %v436 = vmul.f32 %v351, %v417
    %v437 = vmul.f32 %v352, %v421
    %v439 = vlaneseq
    %v440 = vshrl.u32 %v439, 7
    %v441 = vsub.s32 0, %v440
    %v442 = vrot.slane %v307, %v441
    %v443 = vlaneseq
    %v444 = vshrl.u32 %v443, 7
    %v445 = vsub.s32 1, %v444
    %v446 = vrot.slane %v307, %v445
    %v449 = vadd.f32 %v422, %v442
    %v450 = vadd.f32 %v423, %v446
    %v451 = vadd.f32 %v424, %v442
    %v452 = vadd.f32 %v425, %v446
    %v453 = vadd.f32 %v426, %v442
    %v454 = vadd.f32 %v427, %v446
    %v455 = vadd.f32 %v428, %v442
    %v456 = vadd.f32 %v429, %v446
    %v457 = vadd.f32 %v430, %v442
    %v458 = vadd.f32 %v431, %v446
    %v459 = vadd.f32 %v432, %v442
    %v460 = vadd.f32 %v433, %v446
    %v461 = vadd.f32 %v434, %v442
    %v462 = vadd.f32 %v435, %v446
    %v463 = vadd.f32 %v436, %v442
    %v464 = vadd.f32 %v437, %v446
    %v465 = vmax.f32 %v449, 0.0
    %v466 = vmax.f32 %v450, 0.0
    %v467 = vmax.f32 %v451, 0.0
    %v468 = vmax.f32 %v452, 0.0
    %v469 = vmax.f32 %v453, 0.0
    %v470 = vmax.f32 %v454, 0.0
    %v471 = vmax.f32 %v455, 0.0
    %v472 = vmax.f32 %v456, 0.0
    %v473 = vmax.f32 %v457, 0.0
    %v474 = vmax.f32 %v458, 0.0
    %v475 = vmax.f32 %v459, 0.0
    %v476 = vmax.f32 %v460, 0.0
    %v477 = vmax.f32 %v461, 0.0
    %v478 = vmax.f32 %v462, 0.0
    %v479 = vmax.f32 %v463, 0.0
    %v480 = vmax.f32 %v464, 0.0
    %v481 = vpack.c.bf16 %v467, %v465
    %v482 = vpack.c.bf16 %v468, %v466
    %v483 = vpack.c.bf16 %v471, %v469
    %v484 = vpack.c.bf16 %v472, %v470
    %v485 = vpack.c.bf16 %v475, %v473
    %v486 = vpack.c.bf16 %v476, %v474
    %v487 = vpack.c.bf16 %v479, %v477
    %v488 = vpack.c.bf16 %v480, %v478
    %v489 = vld [vmem:[#allocation7] sm:$0xf]
    %v490 = vld [vmem:[#allocation7 + $0x4] sm:$0xf]
    %v491 = vld [vmem:[#allocation7 + $0x8] sm:$0xf]
    %v492 = vld [vmem:[#allocation7 + $0xc] sm:$0xf]
    %v493 = vld [vmem:[#allocation7 + $0x10] sm:$0xf]
    %v494 = vld [vmem:[#allocation7 + $0x14] sm:$0xf]
    %v495 = vld [vmem:[#allocation7 + $0x18] sm:$0xf]
    %v496 = vld [vmem:[#allocation7 + $0x1c] sm:$0xf]
    %v497 = vld [vmem:[#allocation7 + $0x20] sm:$0xf]
    %v498 = vld [vmem:[#allocation7 + $0x24] sm:$0xf]
    %v499 = vld [vmem:[#allocation7 + $0x28] sm:$0xf]
    %v500 = vld [vmem:[#allocation7 + $0x2c] sm:$0xf]
    %v501 = vld [vmem:[#allocation7 + $0x30] sm:$0xf]
    %v502 = vld [vmem:[#allocation7 + $0x34] sm:$0xf]
    %v503 = vld [vmem:[#allocation7 + $0x38] sm:$0xf]
    %v504 = vld [vmem:[#allocation7 + $0x3c] sm:$0xf]
    %v505 = vld [vmem:[#allocation7 + $0x40] sm:$0xf]
    %v506 = vld [vmem:[#allocation7 + $0x44] sm:$0xf]
    %v507 = vld [vmem:[#allocation7 + $0x48] sm:$0xf]
    %v508 = vld [vmem:[#allocation7 + $0x4c] sm:$0xf]
    %v509 = vld [vmem:[#allocation7 + $0x50] sm:$0xf]
    %v510 = vld [vmem:[#allocation7 + $0x54] sm:$0xf]
    %v511 = vld [vmem:[#allocation7 + $0x58] sm:$0xf]
    %v512 = vld [vmem:[#allocation7 + $0x5c] sm:$0xf]
    %v513 = vld [vmem:[#allocation7 + $0x60] sm:$0xf]
    %v514 = vld [vmem:[#allocation7 + $0x64] sm:$0xf]
    %v515 = vld [vmem:[#allocation7 + $0x68] sm:$0xf]
    %v516 = vld [vmem:[#allocation7 + $0x6c] sm:$0xf]
    %v517 = vld [vmem:[#allocation7 + $0x70] sm:$0xf]
    %v518 = vld [vmem:[#allocation7 + $0x74] sm:$0xf]
    %v519 = vld [vmem:[#allocation7 + $0x78] sm:$0xf]
    %v520 = vld [vmem:[#allocation7 + $0x7c] sm:$0xf]
    %v553 = vunpack.c.l.b16 %v489
    %v554 = vunpack.c.l.b16 %v490
    %v555 = vunpack.c.l.b16 %v491
    %v556 = vunpack.c.l.b16 %v492
    %v557 = vunpack.c.l.b16 %v493
    %v558 = vunpack.c.l.b16 %v494
    %v559 = vunpack.c.l.b16 %v495
    %v560 = vunpack.c.l.b16 %v496
    %v561 = vunpack.c.l.b16 %v497
    %v562 = vunpack.c.l.b16 %v498
    %v563 = vunpack.c.l.b16 %v499
    %v564 = vunpack.c.l.b16 %v500
    %v565 = vunpack.c.l.b16 %v501
    %v566 = vunpack.c.l.b16 %v502
    %v567 = vunpack.c.l.b16 %v503
    %v568 = vunpack.c.l.b16 %v504
    %v569 = vunpack.c.l.b16 %v505
    %v570 = vunpack.c.l.b16 %v506
    %v571 = vunpack.c.l.b16 %v507
    %v572 = vunpack.c.l.b16 %v508
    %v573 = vunpack.c.l.b16 %v509
    %v574 = vunpack.c.l.b16 %v510
    %v575 = vunpack.c.l.b16 %v511
    %v576 = vunpack.c.l.b16 %v512
    %v577 = vunpack.c.l.b16 %v513
    %v578 = vunpack.c.l.b16 %v514
    %v579 = vunpack.c.l.b16 %v515
    %v580 = vunpack.c.l.b16 %v516
    %v581 = vunpack.c.l.b16 %v517
    %v582 = vunpack.c.l.b16 %v518
    %v583 = vunpack.c.l.b16 %v519
    %v584 = vunpack.c.l.b16 %v520
    %v585 = vpack.c.b16 %v554, %v553
    %v586 = vpack.c.b16 %v556, %v555
    %v587 = vpack.c.b16 %v558, %v557
    %v588 = vpack.c.b16 %v560, %v559
    %v589 = vpack.c.b16 %v562, %v561
    %v590 = vpack.c.b16 %v564, %v563
    %v591 = vpack.c.b16 %v566, %v565
    %v592 = vpack.c.b16 %v568, %v567
    %v593 = vpack.c.b16 %v570, %v569
    %v594 = vpack.c.b16 %v572, %v571
    %v595 = vpack.c.b16 %v574, %v573
    %v596 = vpack.c.b16 %v576, %v575
    %v597 = vpack.c.b16 %v578, %v577
    %v598 = vpack.c.b16 %v580, %v579
    %v599 = vpack.c.b16 %v582, %v581
    %v600 = vpack.c.b16 %v584, %v583
    %617 = vmatprep.subr.bf16.mxu0 0
    %618 = vmatpush1.bf16.msra.mxu0 %v592
    %619 = vmatprep.subr.bf16.mxu0 0
    %620 = vmatpush1.bf16.msra.mxu0 %v591
    %621 = vmatprep.subr.bf16.mxu0 0
    %622 = vmatpush1.bf16.msra.mxu0 %v590
    %623 = vmatprep.subr.bf16.mxu0 0
    %624 = vmatpush1.bf16.msra.mxu0 %v589
    %625 = vmatprep.subr.bf16.mxu0 0
    %626 = vmatpush1.bf16.msra.mxu0 %v588
    %627 = vmatprep.subr.bf16.mxu0 0
    %628 = vmatpush1.bf16.msra.mxu0 %v587
    %629 = vmatprep.subr.bf16.mxu0 0
    %630 = vmatpush1.bf16.msra.mxu0 %v586
    %631 = vmatprep.subr.bf16.mxu0 0
    %632 = vmatpush1.bf16.msra.mxu0 %v585
    %633 = vmatprep.subr.bf16.mxu0 0
    %634 = vmatpush2.bf16.msra.mxu0 %v600
    %635 = vmatprep.subr.bf16.mxu0 0
    %636 = vmatpush2.bf16.msra.mxu0 %v599
    %637 = vmatprep.subr.bf16.mxu0 0
    %638 = vmatpush2.bf16.msra.mxu0 %v598
    %639 = vmatprep.subr.bf16.mxu0 0
    %640 = vmatpush2.bf16.msra.mxu0 %v597
    %641 = vmatprep.subr.bf16.mxu0 0
    %642 = vmatpush2.bf16.msra.mxu0 %v596
    %643 = vmatprep.subr.bf16.mxu0 0
    %644 = vmatpush2.bf16.msra.mxu0 %v595
    %645 = vmatprep.subr.bf16.mxu0 0
    %646 = vmatpush2.bf16.msra.mxu0 %v594
    %647 = vmatprep.subr.bf16.mxu0 0
    %648 = vmatpush2.bf16.msra.mxu0 %v593
    %649 = vmatprep.mubr.bf16.mxu0 %v482
    %650 = vmatmul.mubr.bf16.gmra.mxu0 %v481
    %v651 = vpop.f32.mrf.mxu0
    %v652 = vadd.f32 0.0, %v651
    %v653 = vpop.f32.mrf.mxu0
    %v654 = vpop.f32.mrf.mxu0
    %v655 = vadd.f32 0.0, %v654
    %v656 = vpop.f32.mrf.mxu0
    %657 = vmatprep.mubr.bf16.mxu0 %v484
    %658 = vmatmul.mubr.bf16.gmra.mxu0 %v483
    %v659 = vpop.f32.mrf.mxu0
    %v660 = vadd.f32 0.0, %v659
    %v661 = vpop.f32.mrf.mxu0
    %v662 = vpop.f32.mrf.mxu0
    %v663 = vadd.f32 0.0, %v662
    %v664 = vpop.f32.mrf.mxu0
    %665 = vmatprep.mubr.bf16.mxu0 %v486
    %666 = vmatmul.mubr.bf16.gmra.mxu0 %v485
    %v667 = vpop.f32.mrf.mxu0
    %v668 = vadd.f32 0.0, %v667
    %v669 = vpop.f32.mrf.mxu0
    %v670 = vpop.f32.mrf.mxu0
    %v671 = vadd.f32 0.0, %v670
    %v672 = vpop.f32.mrf.mxu0
    %673 = vmatprep.mubr.bf16.mxu0 %v488
    %674 = vmatmul.mubr.bf16.gmra.mxu0 %v487
    %v675 = vpop.f32.mrf.mxu0
    %v676 = vadd.f32 0.0, %v675
    %v677 = vpop.f32.mrf.mxu0
    %v678 = vpop.f32.mrf.mxu0
    %v679 = vadd.f32 0.0, %v678
    %v680 = vpop.f32.mrf.mxu0
    %681 = vdwg.mxu0
    %v682 = vpack.c.bf16 %v655, %v652
    %v683 = vpack.c.bf16 %v663, %v660
    %v684 = vpack.c.bf16 %v671, %v668
    %v685 = vpack.c.bf16 %v679, %v676
    %v686 = vld [vmem:[#allocation8] sm:$0xff]
    %v687 = vld [vmem:[#allocation8 + $0x8] sm:$0xff]
    %v688 = vld [vmem:[#allocation8 + $0x10] sm:$0xff]
    %v689 = vld [vmem:[#allocation8 + $0x18] sm:$0xff]
    %v690 = vld [vmem:[#allocation8 + $0x20] sm:$0xff]
    %v691 = vld [vmem:[#allocation8 + $0x28] sm:$0xff]
    %v692 = vld [vmem:[#allocation8 + $0x30] sm:$0xff]
    %v693 = vld [vmem:[#allocation8 + $0x38] sm:$0xff]
    %v694 = vld [vmem:[#allocation8 + $0x40] sm:$0xff]
    %v695 = vld [vmem:[#allocation8 + $0x48] sm:$0xff]
    %v696 = vld [vmem:[#allocation8 + $0x50] sm:$0xff]
    %v697 = vld [vmem:[#allocation8 + $0x58] sm:$0xff]
    %v698 = vld [vmem:[#allocation8 + $0x60] sm:$0xff]
    %v699 = vld [vmem:[#allocation8 + $0x68] sm:$0xff]
    %v700 = vld [vmem:[#allocation8 + $0x70] sm:$0xff]
    %v701 = vld [vmem:[#allocation8 + $0x78] sm:$0xff]
    %v718 = vunpack.c.l.b16 %v686
    %v719 = vunpack.c.h.b16 %v686
    %v720 = vunpack.c.l.b16 %v687
    %v721 = vunpack.c.h.b16 %v687
    %v722 = vunpack.c.l.b16 %v688
    %v723 = vunpack.c.h.b16 %v688
    %v724 = vunpack.c.l.b16 %v689
    %v725 = vunpack.c.h.b16 %v689
    %v726 = vunpack.c.l.b16 %v690
    %v727 = vunpack.c.h.b16 %v690
    %v728 = vunpack.c.l.b16 %v691
    %v729 = vunpack.c.h.b16 %v691
    %v730 = vunpack.c.l.b16 %v692
    %v731 = vunpack.c.h.b16 %v692
    %v732 = vunpack.c.l.b16 %v693
    %v733 = vunpack.c.h.b16 %v693
    %v734 = vunpack.c.l.b16 %v694
    %v735 = vunpack.c.h.b16 %v694
    %v736 = vunpack.c.l.b16 %v695
    %v737 = vunpack.c.h.b16 %v695
    %v738 = vunpack.c.l.b16 %v696
    %v739 = vunpack.c.h.b16 %v696
    %v740 = vunpack.c.l.b16 %v697
    %v741 = vunpack.c.h.b16 %v697
    %v742 = vunpack.c.l.b16 %v698
    %v743 = vunpack.c.h.b16 %v698
    %v744 = vunpack.c.l.b16 %v699
    %v745 = vunpack.c.h.b16 %v699
    %v746 = vunpack.c.l.b16 %v700
    %v747 = vunpack.c.h.b16 %v700
    %v748 = vunpack.c.l.b16 %v701
    %v749 = vunpack.c.h.b16 %v701
    %v750 = vpack.c.b16 %v720, %v718
    %v751 = vpack.c.b16 %v721, %v719
    %v752 = vpack.c.b16 %v724, %v722
    %v753 = vpack.c.b16 %v725, %v723
    %v754 = vpack.c.b16 %v728, %v726
    %v755 = vpack.c.b16 %v729, %v727
    %v756 = vpack.c.b16 %v732, %v730
    %v757 = vpack.c.b16 %v733, %v731
    %v758 = vpack.c.b16 %v736, %v734
    %v759 = vpack.c.b16 %v737, %v735
    %v760 = vpack.c.b16 %v740, %v738
    %v761 = vpack.c.b16 %v741, %v739
    %v762 = vpack.c.b16 %v744, %v742
    %v763 = vpack.c.b16 %v745, %v743
    %v764 = vpack.c.b16 %v748, %v746
    %v765 = vpack.c.b16 %v749, %v747
    %782 = vmatprep.subr.bf16.mxu0 %v765
    %783 = vmatpush1.bf16.msra.mxu0 %v764
    %784 = vmatprep.subr.bf16.mxu0 %v763
    %785 = vmatpush1.bf16.msra.mxu0 %v762
    %786 = vmatprep.subr.bf16.mxu0 %v761
    %787 = vmatpush1.bf16.msra.mxu0 %v760
    %788 = vmatprep.subr.bf16.mxu0 %v759
    %789 = vmatpush1.bf16.msra.mxu0 %v758
    %790 = vmatprep.subr.bf16.mxu0 %v757
    %791 = vmatpush1.bf16.msra.mxu0 %v756
    %792 = vmatprep.subr.bf16.mxu0 %v755
    %793 = vmatpush1.bf16.msra.mxu0 %v754
    %794 = vmatprep.subr.bf16.mxu0 %v753
    %795 = vmatpush1.bf16.msra.mxu0 %v752
    %796 = vmatprep.subr.bf16.mxu0 %v751
    %797 = vmatpush1.bf16.msra.mxu0 %v750
    %798 = vmatprep.subr.bf16.mxu0 0
    %799 = vmatpush2.bf16.msra.mxu0 0
    %800 = vmatprep.subr.bf16.mxu0 0
    %801 = vmatpush2.bf16.msra.mxu0 0
    %802 = vmatprep.subr.bf16.mxu0 0
    %803 = vmatpush2.bf16.msra.mxu0 0
    %804 = vmatprep.subr.bf16.mxu0 0
    %805 = vmatpush2.bf16.msra.mxu0 0
    %806 = vmatprep.subr.bf16.mxu0 0
    %807 = vmatpush2.bf16.msra.mxu0 0
    %808 = vmatprep.subr.bf16.mxu0 0
    %809 = vmatpush2.bf16.msra.mxu0 0
    %810 = vmatprep.subr.bf16.mxu0 0
    %811 = vmatpush2.bf16.msra.mxu0 0
    %812 = vmatprep.subr.bf16.mxu0 0
    %813 = vmatpush2.bf16.msra.mxu0 0
    %814 = vmatprep.mubr.bf16.mxu0 0
    %815 = vmatmul.mubr.bf16.gmra.mxu0 %v682
    %v816 = vpop.f32.mrf.mxu0
    %v817 = vadd.f32 0.0, %v816
    %v818 = vpop.f32.mrf.mxu0
    %v819 = vadd.f32 0.0, %v818
    %v820 = vpop.f32.mrf.mxu0
    %v821 = vadd.f32 0.0, %v820
    %v822 = vpop.f32.mrf.mxu0
    %v823 = vadd.f32 0.0, %v822
    %824 = vmatprep.mubr.bf16.mxu0 0
    %825 = vmatmul.mubr.bf16.gmra.mxu0 %v683
    %v826 = vpop.f32.mrf.mxu0
    %v827 = vadd.f32 0.0, %v826
    %v828 = vpop.f32.mrf.mxu0
    %v829 = vadd.f32 0.0, %v828
    %v830 = vpop.f32.mrf.mxu0
    %v831 = vadd.f32 0.0, %v830
    %v832 = vpop.f32.mrf.mxu0
    %v833 = vadd.f32 0.0, %v832
    %834 = vmatprep.mubr.bf16.mxu0 0
    %835 = vmatmul.mubr.bf16.gmra.mxu0 %v684
    %v836 = vpop.f32.mrf.mxu0
    %v837 = vadd.f32 0.0, %v836
    %v838 = vpop.f32.mrf.mxu0
    %v839 = vadd.f32 0.0, %v838
    %v840 = vpop.f32.mrf.mxu0
    %v841 = vadd.f32 0.0, %v840
    %v842 = vpop.f32.mrf.mxu0
    %v843 = vadd.f32 0.0, %v842
    %844 = vmatprep.mubr.bf16.mxu0 0
    %845 = vmatmul.mubr.bf16.gmra.mxu0 %v685
    %v846 = vpop.f32.mrf.mxu0
    %v847 = vadd.f32 0.0, %v846
    %v848 = vpop.f32.mrf.mxu0
    %v849 = vadd.f32 0.0, %v848
    %v850 = vpop.f32.mrf.mxu0
    %v851 = vadd.f32 0.0, %v850
    %v852 = vpop.f32.mrf.mxu0
    %v853 = vadd.f32 0.0, %v852
    %854 = vdwg.mxu0
    %v855 = vld [vmem:[%s6] sm:$0x3]
    %v856 = vld [vmem:[%s7] sm:$0x3]
    %v857 = vadd.f32 %v817, %v821
    %v858 = vadd.f32 %v857, %v827
    %v859 = vadd.f32 %v858, %v831
    %v860 = vadd.f32 %v859, %v837
    %v861 = vadd.f32 %v860, %v841
    %v862 = vadd.f32 %v861, %v847
    %v863 = vadd.f32 %v862, %v851
    %v864 = vrot.slane %v863, 4
    %v865 = vadd.f32 %v863, %v864
    %v866 = vrot.slane %v865, 2
    %v867 = vadd.f32 %v865, %v866
    %v868 = vrot.slane %v867, 1
    %v869 = vadd.f32 %v867, %v868
    %v870 = vadd.f32 %v819, %v823
    %v871 = vadd.f32 %v870, %v829
    %v872 = vadd.f32 %v871, %v833
    %v873 = vadd.f32 %v872, %v839
    %v874 = vadd.f32 %v873, %v843
    %v875 = vadd.f32 %v874, %v849
    %v876 = vadd.f32 %v875, %v853
    %v877 = vrot.slane %v876, 4
    %v878 = vadd.f32 %v876, %v877
    %v879 = vrot.slane %v878, 2
    %v880 = vadd.f32 %v878, %v879
    %v881 = vrot.slane %v880, 1
    %v882 = vadd.f32 %v880, %v881
    %v883 = vmul.f32 %v869, %v334
    %v884 = vmul.f32 %v882, %v334
    %v885 = vsub.f32 %v817, %v883
    %v886 = vsub.f32 %v819, %v884
    %v887 = vsub.f32 %v821, %v883
    %v888 = vsub.f32 %v823, %v884
    %v889 = vsub.f32 %v827, %v883
    %v890 = vsub.f32 %v829, %v884
    %v891 = vsub.f32 %v831, %v883
    %v892 = vsub.f32 %v833, %v884
    %v893 = vsub.f32 %v837, %v883
    %v894 = vsub.f32 %v839, %v884
    %v895 = vsub.f32 %v841, %v883
    %v896 = vsub.f32 %v843, %v884
    %v897 = vsub.f32 %v847, %v883
    %v898 = vsub.f32 %v849, %v884
    %v899 = vsub.f32 %v851, %v883
    %v900 = vsub.f32 %v853, %v884
    %v901 = vmul.f32 %v885, %v885
    %v902 = vmul.f32 %v886, %v886
    %v903 = vmul.f32 %v887, %v887
    %v904 = vmul.f32 %v888, %v888
    %v905 = vmul.f32 %v889, %v889
    %v906 = vmul.f32 %v890, %v890
    %v907 = vmul.f32 %v891, %v891
    %v908 = vmul.f32 %v892, %v892
    %v909 = vmul.f32 %v893, %v893
    %v910 = vmul.f32 %v894, %v894
    %v911 = vmul.f32 %v895, %v895
    %v912 = vmul.f32 %v896, %v896
    %v913 = vmul.f32 %v897, %v897
    %v914 = vmul.f32 %v898, %v898
    %v915 = vmul.f32 %v899, %v899
    %v916 = vmul.f32 %v900, %v900
    %v917 = vadd.f32 %v901, %v903
    %v918 = vadd.f32 %v917, %v905
    %v919 = vadd.f32 %v918, %v907
    %v920 = vadd.f32 %v919, %v909
    %v921 = vadd.f32 %v920, %v911
    %v922 = vadd.f32 %v921, %v913
    %v923 = vadd.f32 %v922, %v915
    %v924 = vrot.slane %v923, 4
    %v925 = vadd.f32 %v923, %v924
    %v926 = vrot.slane %v925, 2
    %v927 = vadd.f32 %v925, %v926
    %v928 = vrot.slane %v927, 1
    %v929 = vadd.f32 %v927, %v928
    %v930 = vadd.f32 %v902, %v904
    %v931 = vadd.f32 %v930, %v906
    %v932 = vadd.f32 %v931, %v908
    %v933 = vadd.f32 %v932, %v910
    %v934 = vadd.f32 %v933, %v912
    %v935 = vadd.f32 %v934, %v914
    %v936 = vadd.f32 %v935, %v916
    %v937 = vrot.slane %v936, 4
    %v938 = vadd.f32 %v936, %v937
    %v939 = vrot.slane %v938, 2
    %v940 = vadd.f32 %v938, %v939
    %v941 = vrot.slane %v940, 1
    %v942 = vadd.f32 %v940, %v941
    %v943 = vmul.f32 %v929, %v334
    %v944 = vmul.f32 %v942, %v334
    %v945 = vadd.f32 %v943, 1e-05
    %v946 = vadd.f32 %v944, 1e-05
    %v947 = vrsqrt.pop %v945
    %v948 = vrsqrt.pop %v946
    %v950 = vlaneseq
    %v951 = vshrl.u32 %v950, 7
    %v952 = vsub.s32 0, %v951
    %v953 = vrot.slane %v855, %v952
    %v954 = vlaneseq
    %v955 = vshrl.u32 %v954, 7
    %v956 = vsub.s32 1, %v955
    %v957 = vrot.slane %v855, %v956
    %v960 = vmul.f32 %v947, %v953
    %v961 = vmul.f32 %v948, %v957
    %v962 = vlaneseq
    %v963 = vshrl.u32 %v962, 7
    %v964 = vsub.s32 0, %v963
    %v965 = vrot.slane %v960, %v964
    %v966 = vlaneseq
    %v967 = vshrl.u32 %v966, 7
    %v968 = vsub.s32 0, %v967
    %v969 = vrot.slane %v961, %v968
    %v970 = vmul.f32 %v885, %v965
    %v971 = vmul.f32 %v886, %v969
    %v972 = vmul.f32 %v887, %v965
    %v973 = vmul.f32 %v888, %v969
    %v974 = vmul.f32 %v889, %v965
    %v975 = vmul.f32 %v890, %v969
    %v976 = vmul.f32 %v891, %v965
    %v977 = vmul.f32 %v892, %v969
    %v978 = vmul.f32 %v893, %v965
    %v979 = vmul.f32 %v894, %v969
    %v980 = vmul.f32 %v895, %v965
    %v981 = vmul.f32 %v896, %v969
    %v982 = vmul.f32 %v897, %v965
    %v983 = vmul.f32 %v898, %v969
    %v984 = vmul.f32 %v899, %v965
    %v985 = vmul.f32 %v900, %v969
    %v987 = vlaneseq
    %v988 = vshrl.u32 %v987, 7
    %v989 = vsub.s32 0, %v988
    %v990 = vrot.slane %v856, %v989
    %v991 = vlaneseq
    %v992 = vshrl.u32 %v991, 7
    %v993 = vsub.s32 1, %v992
    %v994 = vrot.slane %v856, %v993
    %v997 = vadd.f32 %v970, %v990
    %v998 = vadd.f32 %v971, %v994
    %v999 = vadd.f32 %v972, %v990
    %v1000 = vadd.f32 %v973, %v994
    %v1001 = vadd.f32 %v974, %v990
    %v1002 = vadd.f32 %v975, %v994
    %v1003 = vadd.f32 %v976, %v990
    %v1004 = vadd.f32 %v977, %v994
    %v1005 = vadd.f32 %v978, %v990
    %v1006 = vadd.f32 %v979, %v994
    %v1007 = vadd.f32 %v980, %v990
    %v1008 = vadd.f32 %v981, %v994
    %v1009 = vadd.f32 %v982, %v990
    %v1010 = vadd.f32 %v983, %v994
    %v1011 = vadd.f32 %v984, %v990
    %v1012 = vadd.f32 %v985, %v994
    %v1013 = vmax.f32 %v997, 0.0
    %v1014 = vmax.f32 %v998, 0.0
    %v1015 = vmax.f32 %v999, 0.0
    %v1016 = vmax.f32 %v1000, 0.0
    %v1017 = vmax.f32 %v1001, 0.0
    %v1018 = vmax.f32 %v1002, 0.0
    %v1019 = vmax.f32 %v1003, 0.0
    %v1020 = vmax.f32 %v1004, 0.0
    %v1021 = vmax.f32 %v1005, 0.0
    %v1022 = vmax.f32 %v1006, 0.0
    %v1023 = vmax.f32 %v1007, 0.0
    %v1024 = vmax.f32 %v1008, 0.0
    %v1025 = vmax.f32 %v1009, 0.0
    %v1026 = vmax.f32 %v1010, 0.0
    %v1027 = vmax.f32 %v1011, 0.0
    %v1028 = vmax.f32 %v1012, 0.0
    %v1029 = vpack.c.bf16 %v1015, %v1013
    %v1030 = vpack.c.bf16 %v1016, %v1014
    %v1031 = vpack.c.bf16 %v1019, %v1017
    %v1032 = vpack.c.bf16 %v1020, %v1018
    %v1033 = vpack.c.bf16 %v1023, %v1021
    %v1034 = vpack.c.bf16 %v1024, %v1022
    %v1035 = vpack.c.bf16 %v1027, %v1025
    %v1036 = vpack.c.bf16 %v1028, %v1026
    %v1037 = vld [vmem:[#allocation10] sm:$0xf]
    %v1038 = vld [vmem:[#allocation10 + $0x4] sm:$0xf]
    %v1039 = vld [vmem:[#allocation10 + $0x8] sm:$0xf]
    %v1040 = vld [vmem:[#allocation10 + $0xc] sm:$0xf]
    %v1041 = vld [vmem:[#allocation10 + $0x10] sm:$0xf]
    %v1042 = vld [vmem:[#allocation10 + $0x14] sm:$0xf]
    %v1043 = vld [vmem:[#allocation10 + $0x18] sm:$0xf]
    %v1044 = vld [vmem:[#allocation10 + $0x1c] sm:$0xf]
    %v1045 = vld [vmem:[#allocation10 + $0x20] sm:$0xf]
    %v1046 = vld [vmem:[#allocation10 + $0x24] sm:$0xf]
    %v1047 = vld [vmem:[#allocation10 + $0x28] sm:$0xf]
    %v1048 = vld [vmem:[#allocation10 + $0x2c] sm:$0xf]
    %v1049 = vld [vmem:[#allocation10 + $0x30] sm:$0xf]
    %v1050 = vld [vmem:[#allocation10 + $0x34] sm:$0xf]
    %v1051 = vld [vmem:[#allocation10 + $0x38] sm:$0xf]
    %v1052 = vld [vmem:[#allocation10 + $0x3c] sm:$0xf]
    %v1053 = vld [vmem:[#allocation10 + $0x40] sm:$0xf]
    %v1054 = vld [vmem:[#allocation10 + $0x44] sm:$0xf]
    %v1055 = vld [vmem:[#allocation10 + $0x48] sm:$0xf]
    %v1056 = vld [vmem:[#allocation10 + $0x4c] sm:$0xf]
    %v1057 = vld [vmem:[#allocation10 + $0x50] sm:$0xf]
    %v1058 = vld [vmem:[#allocation10 + $0x54] sm:$0xf]
    %v1059 = vld [vmem:[#allocation10 + $0x58] sm:$0xf]
    %v1060 = vld [vmem:[#allocation10 + $0x5c] sm:$0xf]
    %v1061 = vld [vmem:[#allocation10 + $0x60] sm:$0xf]
    %v1062 = vld [vmem:[#allocation10 + $0x64] sm:$0xf]
    %v1063 = vld [vmem:[#allocation10 + $0x68] sm:$0xf]
    %v1064 = vld [vmem:[#allocation10 + $0x6c] sm:$0xf]
    %v1065 = vld [vmem:[#allocation10 + $0x70] sm:$0xf]
    %v1066 = vld [vmem:[#allocation10 + $0x74] sm:$0xf]
    %v1067 = vld [vmem:[#allocation10 + $0x78] sm:$0xf]
    %v1068 = vld [vmem:[#allocation10 + $0x7c] sm:$0xf]
    %v1069 = vld [vmem:[%s9] sm:$0x1]
    %v1071 = vlaneseq
    %v1072 = vshrl.u32 %v1071, 7
    %v1073 = vsub.s32 0, %v1072
    %v1074 = vrot.slane %v1069, %v1073
    %v1108 = vunpack.c.l.b16 %v1037
    %v1109 = vunpack.c.l.b16 %v1038
    %v1110 = vunpack.c.l.b16 %v1039
    %v1111 = vunpack.c.l.b16 %v1040
    %v1112 = vunpack.c.l.b16 %v1041
    %v1113 = vunpack.c.l.b16 %v1042
    %v1114 = vunpack.c.l.b16 %v1043
    %v1115 = vunpack.c.l.b16 %v1044
    %v1116 = vunpack.c.l.b16 %v1045
    %v1117 = vunpack.c.l.b16 %v1046
    %v1118 = vunpack.c.l.b16 %v1047
    %v1119 = vunpack.c.l.b16 %v1048
    %v1120 = vunpack.c.l.b16 %v1049
    %v1121 = vunpack.c.l.b16 %v1050
    %v1122 = vunpack.c.l.b16 %v1051
    %v1123 = vunpack.c.l.b16 %v1052
    %v1124 = vunpack.c.l.b16 %v1053
    %v1125 = vunpack.c.l.b16 %v1054
    %v1126 = vunpack.c.l.b16 %v1055
    %v1127 = vunpack.c.l.b16 %v1056
    %v1128 = vunpack.c.l.b16 %v1057
    %v1129 = vunpack.c.l.b16 %v1058
    %v1130 = vunpack.c.l.b16 %v1059
    %v1131 = vunpack.c.l.b16 %v1060
    %v1132 = vunpack.c.l.b16 %v1061
    %v1133 = vunpack.c.l.b16 %v1062
    %v1134 = vunpack.c.l.b16 %v1063
    %v1135 = vunpack.c.l.b16 %v1064
    %v1136 = vunpack.c.l.b16 %v1065
    %v1137 = vunpack.c.l.b16 %v1066
    %v1138 = vunpack.c.l.b16 %v1067
    %v1139 = vunpack.c.l.b16 %v1068
    %v1140 = vpack.c.b16 %v1109, %v1108
    %v1141 = vpack.c.b16 %v1111, %v1110
    %v1142 = vpack.c.b16 %v1113, %v1112
    %v1143 = vpack.c.b16 %v1115, %v1114
    %v1144 = vpack.c.b16 %v1117, %v1116
    %v1145 = vpack.c.b16 %v1119, %v1118
    %v1146 = vpack.c.b16 %v1121, %v1120
    %v1147 = vpack.c.b16 %v1123, %v1122
    %v1148 = vpack.c.b16 %v1125, %v1124
    %v1149 = vpack.c.b16 %v1127, %v1126
    %v1150 = vpack.c.b16 %v1129, %v1128
    %v1151 = vpack.c.b16 %v1131, %v1130
    %v1152 = vpack.c.b16 %v1133, %v1132
    %v1153 = vpack.c.b16 %v1135, %v1134
    %v1154 = vpack.c.b16 %v1137, %v1136
    %v1155 = vpack.c.b16 %v1139, %v1138
    %1172 = vmatprep.subr.bf16.mxu0 0
    %1173 = vmatpush1.bf16.msra.mxu0 %v1147
    %1174 = vmatprep.subr.bf16.mxu0 0
    %1175 = vmatpush1.bf16.msra.mxu0 %v1146
    %1176 = vmatprep.subr.bf16.mxu0 0
    %1177 = vmatpush1.bf16.msra.mxu0 %v1145
    %1178 = vmatprep.subr.bf16.mxu0 0
    %1179 = vmatpush1.bf16.msra.mxu0 %v1144
    %1180 = vmatprep.subr.bf16.mxu0 0
    %1181 = vmatpush1.bf16.msra.mxu0 %v1143
    %1182 = vmatprep.subr.bf16.mxu0 0
    %1183 = vmatpush1.bf16.msra.mxu0 %v1142
    %1184 = vmatprep.subr.bf16.mxu0 0
    %1185 = vmatpush1.bf16.msra.mxu0 %v1141
    %1186 = vmatprep.subr.bf16.mxu0 0
    %1187 = vmatpush1.bf16.msra.mxu0 %v1140
    %1188 = vmatprep.subr.bf16.mxu0 0
    %1189 = vmatpush2.bf16.msra.mxu0 %v1155
    %1190 = vmatprep.subr.bf16.mxu0 0
    %1191 = vmatpush2.bf16.msra.mxu0 %v1154
    %1192 = vmatprep.subr.bf16.mxu0 0
    %1193 = vmatpush2.bf16.msra.mxu0 %v1153
    %1194 = vmatprep.subr.bf16.mxu0 0
    %1195 = vmatpush2.bf16.msra.mxu0 %v1152
    %1196 = vmatprep.subr.bf16.mxu0 0
    %1197 = vmatpush2.bf16.msra.mxu0 %v1151
    %1198 = vmatprep.subr.bf16.mxu0 0
    %1199 = vmatpush2.bf16.msra.mxu0 %v1150
    %1200 = vmatprep.subr.bf16.mxu0 0
    %1201 = vmatpush2.bf16.msra.mxu0 %v1149
    %1202 = vmatprep.subr.bf16.mxu0 0
    %1203 = vmatpush2.bf16.msra.mxu0 %v1148
    %1204 = vmatprep.mubr.bf16.mxu0 %v1030
    %1205 = vmatmul.mubr.bf16.gmra.mxu0 %v1029
    %v1206 = vpop.f32.mrf.mxu0
    %v1207 = vadd.f32 %v1074, %v1206
    %v1208 = vpop.f32.mrf.mxu0
    %v1209 = vpop.f32.mrf.mxu0
    %v1210 = vadd.f32 %v1074, %v1209
    %v1211 = vpop.f32.mrf.mxu0
    %1212 = vmatprep.mubr.bf16.mxu0 %v1032
    %1213 = vmatmul.mubr.bf16.gmra.mxu0 %v1031
    %v1214 = vpop.f32.mrf.mxu0
    %v1215 = vadd.f32 %v1074, %v1214
    %v1216 = vpop.f32.mrf.mxu0
    %v1217 = vpop.f32.mrf.mxu0
    %v1218 = vadd.f32 %v1074, %v1217
    %v1219 = vpop.f32.mrf.mxu0
    %1220 = vmatprep.mubr.bf16.mxu0 %v1034
    %1221 = vmatmul.mubr.bf16.gmra.mxu0 %v1033
    %v1222 = vpop.f32.mrf.mxu0
    %v1223 = vadd.f32 %v1074, %v1222
    %v1224 = vpop.f32.mrf.mxu0
    %v1225 = vpop.f32.mrf.mxu0
    %v1226 = vadd.f32 %v1074, %v1225
    %v1227 = vpop.f32.mrf.mxu0
    %1228 = vmatprep.mubr.bf16.mxu0 %v1036
    %1229 = vmatmul.mubr.bf16.gmra.mxu0 %v1035
    %v1230 = vpop.f32.mrf.mxu0
    %v1231 = vadd.f32 %v1074, %v1230
    %v1232 = vpop.f32.mrf.mxu0
    %v1233 = vpop.f32.mrf.mxu0
    %v1234 = vadd.f32 %v1074, %v1233
    %v1235 = vpop.f32.mrf.mxu0
    %1236 = vdwg.mxu0
    %1237 = vst [vmem:[#allocation11] sm:$0xff] %v1207
    %1238 = vst [vmem:[#allocation11 + $0x8] sm:$0xff] %v1210
    %1239 = vst [vmem:[#allocation11 + $0x10] sm:$0xff] %v1215
    %1240 = vst [vmem:[#allocation11 + $0x18] sm:$0xff] %v1218
    %1241 = vst [vmem:[#allocation11 + $0x20] sm:$0xff] %v1223
    %1242 = vst [vmem:[#allocation11 + $0x28] sm:$0xff] %v1226
    %1243 = vst [vmem:[#allocation11 + $0x30] sm:$0xff] %v1231
    %1244 = vst [vmem:[#allocation11 + $0x38] sm:$0xff] %v1234
    // Predicated region
    $region62: #{tpu_custom_call.1} parent=1 // pred_check
      _
    $region63: #{tpu_custom_call.1} parent=1 // pred_check_branch
      %1246 = sbr.rel (0) target = $region65
    $region64: #{tpu_custom_call.1} parent=1 // pred_region
      %s1248 = ssub.s32 1024, 1024
      %1249 = vsyncadd [#allocation4], %s1248
      %s1250 = sshll.u32 [#allocation11], 4
      %s1251 = int_to_ptr.vmem [resolvable:$true] %s1250
      %1256 = dma.vmem_to_hbm [thread:$0]  %s1251, 1024, %s10, [#allocation4], 128, 128, 8
    $region65: #{tpu_custom_call.1} parent=1 // pred_fallthru
      _
    // Predicated region
    $region66: #{tpu_custom_call.1} parent=1 // pred_check
      _
    $region67: #{tpu_custom_call.1} parent=1 // pred_check_branch
      %1258 = sbr.rel (0) target = $region69
    $region68: #{tpu_custom_call.1} parent=1 // pred_region
      %1259 = dma.done [#allocation4], 1024
    $region69: #{tpu_custom_call.1} parent=1 // pred_fallthru
      _
    %1260 = vsyncpa [#allocation3], 1
    %1261 = vsyncpa [#allocation6], 1
    %1262 = vsyncpa [#allocation9], 1
    %1263 = vsyncpa [#allocation4], 1

</llo_original>
